<compile_context>
chip_gen: v5e
topology: v5e:2x2
jax: 0.10.0
libtpu: 0.0.40
codegen_flags: <defaults>
</compile_context>

<pallas_src>
import jax
import jax.numpy as jnp
from jax import lax
from jax.experimental import pallas as pl
from jax.experimental.pallas import tpu as pltpu


# ----------------------------- kernels --------------------------------------

def _make_csp_space_kernel(b_tile):
    def kernel(f_ref, x_ref, o_ref):
        # f_ref: (F, C)  x_ref: (b_tile, C, tT)  o_ref: (b_tile, F, tT)
        f = f_ref[...]
        for b in range(b_tile):  # static unroll; no batch-dim relayout
            o_ref[b] = jnp.dot(
                f, x_ref[b], preferred_element_type=jnp.float32
            ).astype(o_ref.dtype)
    return kernel


def _make_avg_power_kernel(b_tile, t_tile, T, F, log, ragged):
    inv_t = 1.0 / T  # static

    def kernel(f_ref, x_ref, o_ref, acc_ref):
        # f_ref: (F, C)  x_ref: (b_tile, C, tT)
        # o_ref: (b_tile, F, 1)  acc_ref: (b_tile, F, 1) f32
        t = pl.program_id(1)

        @pl.when(t == 0)
        def _():
            acc_ref[...] = jnp.zeros_like(acc_ref)

        f = f_ref[...]
        if ragged:  # static python bool: only compiled when T % t_tile != 0
            col = lax.broadcasted_iota(jnp.int32, (F, t_tile), 1)
            mask = col < (T - t * t_tile)

        for b in range(b_tile):  # static unroll
            xw = jnp.dot(f, x_ref[b], preferred_element_type=jnp.float32)
            sq = xw * xw
            if ragged:
                sq = jnp.where(mask, sq, 0.0)  # NaN-safe select of garbage tail
            # 2-D (sublane, 1) partial reduce: no per-tile 1-D relayout.
            acc_ref[b] += jnp.sum(sq, axis=1, keepdims=True)

        @pl.when(t == pl.num_programs(1) - 1)
        def _():
            power = acc_ref[...] * inv_t  # (b_tile, F, 1) f32
            if log:  # static python bool
                power = jnp.log(power)
            o_ref[...] = power.astype(o_ref.dtype)

    return kernel


# ----------------------------- tiling helper ---------------------------------

def _choose_tiles(B, C, T, F, in_itemsize, produce_space,
                  max_t_tile=2048, max_b_tile=16,
                  target_step_bytes=1 << 20,
                  vmem_budget_bytes=12 * 1024 * 1024):
    """Pick (b_tile, t_tile).

    t_tile: lane-dense (multiple of 128) or the full T (always legal).
    b_tile: largest divisor of B (<= max_b_tile) that keeps the
    double-buffered working set inside a conservative VMEM budget, stopping
    once each pipeline step moves ~target_step_bytes of HBM traffic.
    """
    if T <= 256:
        t_tile = T  # full-dim block is always legal
    else:
        t_tile = max(128, (min(max_t_tile, T) // 128) * 128)

    # Bytes per time-column per batch row (input + output for csp_space).
    per_col_bytes = in_itemsize * C + (4 * F if produce_space else 0)

    # Shrink t_tile if even a single batch row over-fills the budget.
    while t_tile > 128 and 2 * per_col_bytes * t_tile > vmem_budget_bytes:
        t_tile = max(128, ((t_tile // 2) // 128) * 128)

    per_batch_step_bytes = per_col_bytes * t_tile
    b_tile = 1
    for bb in range(1, min(B, max_b_tile) + 1):
        if B % bb:
            continue
        if 2 * bb * per_batch_step_bytes > vmem_budget_bytes:
            break
        b_tile = bb
        if bb * per_batch_step_bytes >= target_step_bytes:
            break  # big enough to amortize per-step overhead; keep parallelism
    return b_tile, t_tile


# ----------------------------- wrapper ---------------------------------------

def csp_forward(filters, x, transform_into="csp_space", log=False,
                input_dtype=None, max_t_tile=2048, max_b_tile=16):
    """filters: (F, C), x: (B, C, T).  Returns f32 output.

    input_dtype: optionally cast filters/x (e.g. jnp.bfloat16) to halve the
    HBM->VMEM traffic; accumulation stays f32.
    """
    F, C = filters.shape
    B, Cx, T = x.shape
    assert C == Cx, "channel mismatch"
    if transform_into not in ("csp_space", "average_power"):
        raise Exception(f"{transform_into} is not valid!")
    produce_space = transform_into == "csp_space"

    if input_dtype is not None:
        filters = filters.astype(input_dtype)
        x = x.astype(input_dtype)

    b_tile, t_tile = _choose_tiles(
        B, C, T, F, jnp.dtype(x.dtype).itemsize, produce_space,
        max_t_tile=max_t_tile, max_b_tile=max_b_tile)
    num_b = B // b_tile
    num_t = pl.cdiv(T, t_tile)
    ragged = (T % t_tile) != 0

    f_spec = pl.BlockSpec((F, C), lambda b, t: (0, 0))              # resident
    x_spec = pl.BlockSpec((b_tile, C, t_tile), lambda b, t: (b, 0, t))

    if produce_space:
        # Partial edge blocks along T are handled by Pallas' masked writeback;
        # no host-side padding pass over x.
        return pl.pallas_call(
            _make_csp_space_kernel(b_tile),
            out_shape=jax.ShapeDtypeStruct((B, F, T), jnp.float32),
            grid_spec=pltpu.PrefetchScalarGridSpec(
                num_scalar_prefetch=0,
                grid=(num_b, num_t),
                in_specs=[f_spec, x_spec],
                out_specs=pl.BlockSpec((b_tile, F, t_tile),
                                       lambda b, t: (b, 0, t)),
            ),
            compiler_params=pltpu.CompilerParams(
                dimension_semantics=("parallel", "parallel")),
        )(filters, x)

    # average_power: T grid axis is a reduction (accumulator pattern).
    out = pl.pallas_call(
        _make_avg_power_kernel(b_tile, t_tile, T, F, log, ragged),
        out_shape=jax.ShapeDtypeStruct((B, F, 1), jnp.float32),
        grid_spec=pltpu.PrefetchScalarGridSpec(
            num_scalar_prefetch=0,
            grid=(num_b, num_t),
            in_specs=[f_spec, x_spec],
            out_specs=pl.BlockSpec((b_tile, F, 1), lambda b, t: (b, 0, 0)),
            scratch_shapes=[pltpu.VMEM((b_tile, F, 1), jnp.float32)],
        ),
        compiler_params=pltpu.CompilerParams(
            dimension_semantics=("parallel", "arbitrary")),
    )(filters, x)
    return out[:, :, 0]


# ----------------------------- reference -------------------------------------

def csp_reference(filters, x, transform_into="csp_space", log=False):
    x_ = jnp.einsum("fc,bct->bft", filters, x)
    if transform_into == "csp_space":
        return x_
    power = jnp.mean(jnp.square(x_), axis=2)
    if log:
        power = jnp.log(power)
    return power


# ----------------------------- main -------------------------------------------

if __name__ == "__main__":
    B, C, T, F = 4, 8, 512, 8   # small, lane/sublane-aligned shapes

    key = jax.random.PRNGKey(0)
    k_filt, k_x = jax.random.split(key)
    filters = jax.random.normal(k_filt, (F, C), dtype=jnp.float32)
    x = jax.random.normal(k_x, (B, C, T), dtype=jnp.float32)

    ref_space = csp_reference(filters, x, "csp_space")
    ref_pow_log = csp_reference(filters, x, "average_power", log=True)

    # 1) csp_space, single T tile, full batch block
    y_space = jax.block_until_ready(csp_forward(filters, x, "csp_space"))
    assert y_space.shape == (B, F, T)
    assert jnp.allclose(y_space, ref_space, atol=1e-4, rtol=1e-4)

    # 2) csp_space, forced multi-tile T pipeline (grid = (1, 4), b_tile = 4)
    y_tiled = jax.block_until_ready(
        csp_forward(filters, x, "csp_space", max_t_tile=128))
    assert jnp.allclose(y_tiled, ref_space, atol=1e-4, rtol=1e-4)

    # 3) average_power + log, multi-tile T reduction (accumulator path)
    y_pow = jax.block_until_ready(
        csp_forward(filters, x, "average_power", log=True, max_t_tile=128))
    assert y_pow.shape == (B, F)
    assert jnp.allclose(y_pow, ref_pow_log, atol=1e-4, rtol=1e-4)

    # 4) smaller batch block (exercises the batch-block index mapping)
    y_pow2 = jax.block_until_ready(
        csp_forward(filters, x, "average_power", log=True,
                    max_t_tile=128, max_b_tile=2))
    assert jnp.allclose(y_pow2, ref_pow_log, atol=1e-4, rtol=1e-4)

    # 5) ragged T (partial last block; no host-side padding of x)
    x_ragged = jax.random.normal(jax.random.PRNGKey(1), (B, C, 320),
                                 dtype=jnp.float32)
    ref_space_r = csp_reference(filters, x_ragged, "csp_space")
    ref_pow_r = csp_reference(filters, x_ragged, "average_power", log=False)
    y_sr = jax.block_until_ready(
        csp_forward(filters, x_ragged, "csp_space", max_t_tile=128))
    assert jnp.allclose(y_sr, ref_space_r, atol=1e-4, rtol=1e-4)
    y_pr = jax.block_until_ready(
        csp_forward(filters, x_ragged, "average_power", log=False,
                    max_t_tile=128))
    assert jnp.allclose(y_pr, ref_pow_r, atol=1e-4, rtol=1e-4)

    # 6) optional bf16 HBM-transfer path (f32 MXU accumulation), loose tolerance
    y_bf16 = jax.block_until_ready(
        csp_forward(filters, x, "csp_space",
                    input_dtype=jnp.bfloat16, max_t_tile=128))
    assert jnp.allclose(y_bf16, ref_space, atol=1e-1, rtol=5e-2)

    print("KERNEL_OK")
</pallas_src>

<mosaic_0001>
module attributes {stable_mosaic.version = 11 : i64} {
  func.func @kernel(%arg0: i32, %arg1: i32, %arg2: memref<8x8xf32, #tpu.memory_space<vmem>>, %arg3: memref<4x8x512xf32, #tpu.memory_space<vmem>>, %arg4: memref<4x8x512xf32, #tpu.memory_space<vmem>>) attributes {dimension_semantics = [#tpu.dimension_semantics<parallel>, #tpu.dimension_semantics<parallel>], iteration_bounds = array<i64: 1, 1>, scalar_prefetch = 0 : i64, scratch_operands = 0 : i64, tpu.core_type = #tpu.core_type<tc>, window_params = [{pipeline_mode = #tpu.pipeline_mode<synchronous>, transform_indices = @transform_0, window_bounds = array<i64: 8, 8>}, {transform_indices = @transform_1, window_bounds = array<i64: 4, 8, 512>}, {transform_indices = @transform_2, window_bounds = array<i64: 4, 8, 512>}]} {
    %c0 = arith.constant 0 : index
    %c0_0 = arith.constant 0 : index
    %0 = vector.load %arg2[%c0, %c0_0] : memref<8x8xf32, #tpu.memory_space<vmem>>, vector<8x8xf32>
    %c0_1 = arith.constant 0 : index
    %c0_2 = arith.constant 0 : index
    %c0_3 = arith.constant 0 : index
    %1 = vector.load %arg3[%c0_1, %c0_2, %c0_3] : memref<4x8x512xf32, #tpu.memory_space<vmem>>, vector<1x8x512xf32>
    %2 = vector.shape_cast %1 : vector<1x8x512xf32> to vector<8x512xf32>
    %cst = arith.constant dense<0.000000e+00> : vector<8x512xf32>
    %3 = tpu.matmul %0, %2, %cst {dimension_numbers = #tpu.dot_dimension_numbers<[1], [0], [0], [1], [0, 0, 1, 1], [], []>} : vector<8x8xf32>, vector<8x512xf32>, vector<8x512xf32> -> vector<8x512xf32>
    %c0_4 = arith.constant 0 : index
    %c0_5 = arith.constant 0 : index
    %c0_6 = arith.constant 0 : index
    %4 = vector.load %arg4[%c0_4, %c0_5, %c0_6] : memref<4x8x512xf32, #tpu.memory_space<vmem>>, vector<1x8x512xf32>
    %5 = vector.shape_cast %4 : vector<1x8x512xf32> to vector<8x512xf32>
    %6 = vector.shape_cast %3 : vector<8x512xf32> to vector<1x8x512xf32>
    tpu.vector_store %arg4[%c0_4, %c0_5, %c0_6], %6 {strides = array<i32>} : memref<4x8x512xf32, #tpu.memory_space<vmem>>, vector<1x8x512xf32>,
    %c1 = arith.constant 1 : index
    %c0_7 = arith.constant 0 : index
    %c0_8 = arith.constant 0 : index
    %7 = vector.load %arg3[%c1, %c0_7, %c0_8] : memref<4x8x512xf32, #tpu.memory_space<vmem>>, vector<1x8x512xf32>
    %8 = vector.shape_cast %7 : vector<1x8x512xf32> to vector<8x512xf32>
    %cst_9 = arith.constant dense<0.000000e+00> : vector<8x512xf32>
    %9 = tpu.matmul %0, %8, %cst_9 {dimension_numbers = #tpu.dot_dimension_numbers<[1], [0], [0], [1], [0, 0, 1, 1], [], []>} : vector<8x8xf32>, vector<8x512xf32>, vector<8x512xf32> -> vector<8x512xf32>
    %c1_10 = arith.constant 1 : index
    %c0_11 = arith.constant 0 : index
    %c0_12 = arith.constant 0 : index
    %10 = vector.load %arg4[%c1_10, %c0_11, %c0_12] : memref<4x8x512xf32, #tpu.memory_space<vmem>>, vector<1x8x512xf32>
    %11 = vector.shape_cast %10 : vector<1x8x512xf32> to vector<8x512xf32>
    %12 = vector.shape_cast %9 : vector<8x512xf32> to vector<1x8x512xf32>
    tpu.vector_store %arg4[%c1_10, %c0_11, %c0_12], %12 {strides = array<i32>} : memref<4x8x512xf32, #tpu.memory_space<vmem>>, vector<1x8x512xf32>,
    %c2 = arith.constant 2 : index
    %c0_13 = arith.constant 0 : index
    %c0_14 = arith.constant 0 : index
    %13 = vector.load %arg3[%c2, %c0_13, %c0_14] : memref<4x8x512xf32, #tpu.memory_space<vmem>>, vector<1x8x512xf32>
    %14 = vector.shape_cast %13 : vector<1x8x512xf32> to vector<8x512xf32>
    %cst_15 = arith.constant dense<0.000000e+00> : vector<8x512xf32>
    %15 = tpu.matmul %0, %14, %cst_15 {dimension_numbers = #tpu.dot_dimension_numbers<[1], [0], [0], [1], [0, 0, 1, 1], [], []>} : vector<8x8xf32>, vector<8x512xf32>, vector<8x512xf32> -> vector<8x512xf32>
    %c2_16 = arith.constant 2 : index
    %c0_17 = arith.constant 0 : index
    %c0_18 = arith.constant 0 : index
    %16 = vector.load %arg4[%c2_16, %c0_17, %c0_18] : memref<4x8x512xf32, #tpu.memory_space<vmem>>, vector<1x8x512xf32>
    %17 = vector.shape_cast %16 : vector<1x8x512xf32> to vector<8x512xf32>
    %18 = vector.shape_cast %15 : vector<8x512xf32> to vector<1x8x512xf32>
    tpu.vector_store %arg4[%c2_16, %c0_17, %c0_18], %18 {strides = array<i32>} : memref<4x8x512xf32, #tpu.memory_space<vmem>>, vector<1x8x512xf32>,
    %c3 = arith.constant 3 : index
    %c0_19 = arith.constant 0 : index
    %c0_20 = arith.constant 0 : index
    %19 = vector.load %arg3[%c3, %c0_19, %c0_20] : memref<4x8x512xf32, #tpu.memory_space<vmem>>, vector<1x8x512xf32>
    %20 = vector.shape_cast %19 : vector<1x8x512xf32> to vector<8x512xf32>
    %cst_21 = arith.constant dense<0.000000e+00> : vector<8x512xf32>
    %21 = tpu.matmul %0, %20, %cst_21 {dimension_numbers = #tpu.dot_dimension_numbers<[1], [0], [0], [1], [0, 0, 1, 1], [], []>} : vector<8x8xf32>, vector<8x512xf32>, vector<8x512xf32> -> vector<8x512xf32>
    %c3_22 = arith.constant 3 : index
    %c0_23 = arith.constant 0 : index
    %c0_24 = arith.constant 0 : index
    %22 = vector.load %arg4[%c3_22, %c0_23, %c0_24] : memref<4x8x512xf32, #tpu.memory_space<vmem>>, vector<1x8x512xf32>
    %23 = vector.shape_cast %22 : vector<1x8x512xf32> to vector<8x512xf32>
    %24 = vector.shape_cast %21 : vector<8x512xf32> to vector<1x8x512xf32>
    tpu.vector_store %arg4[%c3_22, %c0_23, %c0_24], %24 {strides = array<i32>} : memref<4x8x512xf32, #tpu.memory_space<vmem>>, vector<1x8x512xf32>,
    return
  }
  func.func @transform_0(%arg0: i32, %arg1: i32) -> (i32, i32) {
    %c0_i32 = arith.constant 0 : i32
    %c0_i32_0 = arith.constant 0 : i32
    %c0_i32_1 = arith.constant 0 : i32
    return %c0_i32, %c0_i32_0 : i32, i32
  }
  func.func @transform_1(%arg0: i32, %arg1: i32) -> (i32, i32, i32) {
    %c0_i32 = arith.constant 0 : i32
    %c0_i32_0 = arith.constant 0 : i32
    return %arg0, %c0_i32, %arg1 : i32, i32, i32
  }
  func.func @transform_2(%arg0: i32, %arg1: i32) -> (i32, i32, i32) {
    %c0_i32 = arith.constant 0 : i32
    %c0_i32_0 = arith.constant 0 : i32
    return %arg0, %c0_i32, %arg1 : i32, i32, i32
  }
}

</mosaic_0001>

<llo_original>
// kernel: tpu_custom_call.1
$region0: #{tpu_custom_call.1}
  #allocation0 [shape = 'u32[]', space=smem, size = 0x4, offset = 0x4, fixed_abs, tag = 'smem constant byte address 0x4 - core index']
  #allocation1 [shape = 'u32[72,128]{1,0:T(1,128)}', space=vmem, size = 0x9000, scoped, tag = 'internal scratch']
  %s0 = inlined_call_operand.hbm [shape: f32[8,8], index: 0, kind: input, shape index: {}]
  %s1 = inlined_call_operand.hbm [shape: f32[4,8,512], index: 1, kind: input, shape index: {}]
  %s2 = inlined_call_operand.hbm [shape: f32[4,8,512], index: 2, kind: output, shape index: {}]
  %s3 = sld [smem:[#allocation0]]
  $region26: #{tpu_custom_call.1} parent=0
    _
  %s5 = ssub.s32 1, %s3
  %s6 = scalar_select 0, %s5, %s3
  $region1: #{tpu_custom_call.1} parent=0
    #allocation2 [shape = 'u8[4096]{0}', space=vmem, size = 0x1000, scoped, tag = 'input window, operand 0, single buffered']
    #allocation3 [shape = 's32[1]{0}', space=sflag, size = 0x4, scoped, tag = 'scoped memory for tpu_custom_call.1']
    #allocation4 [shape = 's32[1]{0}', space=sflag, size = 0x4, scoped, tag = 'scoped memory for tpu_custom_call.1']
    #allocation5 [shape = 'u8[65536]{0}', space=vmem, size = 0x10000, scoped, tag = 'input window, operand 1, single buffered']
    #allocation6 [shape = 's32[1]{0}', space=sflag, size = 0x4, scoped, tag = 'scoped memory for tpu_custom_call.1']
    #allocation7 [shape = 'u8[65536]{0}', space=vmem, size = 0x10000, scoped, tag = 'output window, operand 0, single buffered']
    %7 = vsyncpa [#allocation3], 0
    %8 = vsyncpa [#allocation6], 0
    %9 = vsyncpa [#allocation4], 0
    // Predicated region
    $region2: #{tpu_custom_call.1} parent=1 // pred_check
      _
    $region3: #{tpu_custom_call.1} parent=1 // pred_check_branch
      %11 = sbr.rel (0) target = $region5
    $region4: #{tpu_custom_call.1} parent=1 // pred_region
      %13 = vsyncadd [#allocation3], 0
      %s15 = sshll.u32 %s0, 4
      %s16 = int_to_ptr.hbm [resolvable:$true] %s15
      %s17 = sshll.u32 [#allocation2], 4
      %s18 = int_to_ptr.vmem [resolvable:$true] %s17
      %20 = dma.hbm_to_vmem [thread:$0]  %s16, 128, %s18, [#allocation3]
    $region5: #{tpu_custom_call.1} parent=1 // pred_fallthru
      _
    // Predicated region
    $region6: #{tpu_custom_call.1} parent=1 // pred_check
      _
    $region7: #{tpu_custom_call.1} parent=1 // pred_check_branch
      %22 = sbr.rel (0) target = $region9
    $region8: #{tpu_custom_call.1} parent=1 // pred_region
      %24 = vsyncadd [#allocation6], 0
      %s25 = sshll.u32 %s1, 4
      %s26 = int_to_ptr.hbm [resolvable:$true] %s25
      %s27 = sshll.u32 [#allocation5], 4
      %s28 = int_to_ptr.vmem [resolvable:$true] %s27
      %33 = dma.hbm_to_vmem [thread:$0]  %s26, 2048, %s28, [#allocation6], 512, 512, 32
    $region9: #{tpu_custom_call.1} parent=1 // pred_fallthru
      _
    // Predicated region
    $region10: #{tpu_custom_call.1} parent=1 // pred_check
      _
    $region11: #{tpu_custom_call.1} parent=1 // pred_check_branch
      %35 = sbr.rel (0) target = $region13
    $region12: #{tpu_custom_call.1} parent=1 // pred_region
      %37 = dma.done [#allocation3], 128
    $region13: #{tpu_custom_call.1} parent=1 // pred_fallthru
      _
    // Predicated region
    $region14: #{tpu_custom_call.1} parent=1 // pred_check
      _
    $region15: #{tpu_custom_call.1} parent=1 // pred_check_branch
      %39 = sbr.rel (0) target = $region17
    $region16: #{tpu_custom_call.1} parent=1 // pred_region
      %41 = dma.done [#allocation6], 2048
    $region17: #{tpu_custom_call.1} parent=1 // pred_fallthru
      _
    %v42 = vld [vmem:[#allocation2] sm:$0xff]
    %v43 = vld [vmem:[#allocation5] sm:$0xff]
    %v44 = vld [vmem:[#allocation5 + $0x8] sm:$0xff]
    %v45 = vld [vmem:[#allocation5 + $0x10] sm:$0xff]
    %v46 = vld [vmem:[#allocation5 + $0x18] sm:$0xff]
    %vm47 = vcmask 64512
    %v49 = vsel %vm47, %v42, 0
    %51 = vmatpush.msra.mxu0 0.0
    %52 = vmatpush.msra.mxu0 0.0
    %53 = vmatpush.msra.mxu0 0.0
    %54 = vmatpush.msra.mxu0 0.0
    %55 = vmatpush.msra.mxu0 0.0
    %56 = vmatpush.msra.mxu0 0.0
    %57 = vmatpush.msra.mxu0 0.0
    %58 = vmatpush.msra.mxu0 0.0
    %59 = vmatpush.msra.mxu0 0.0
    %60 = vmatpush.msra.mxu0 0.0
    %61 = vmatpush.msra.mxu0 0.0
    %62 = vmatpush.msra.mxu0 0.0
    %63 = vmatpush.msra.mxu0 0.0
    %64 = vmatpush.msra.mxu0 0.0
    %65 = vmatpush.msra.mxu0 0.0
    %66 = vmatpush.msra.mxu0 %v43
    %67 = vmatmul.f32.gmra.mxu0 %v49
    %v68 = vpop.f32.mrf.mxu0
    %v69 = vadd.f32 0.0, %v68
    %70 = vdwg.mxu0
    %71 = vmatpush.msra.mxu0 0.0
    %72 = vmatpush.msra.mxu0 0.0
    %73 = vmatpush.msra.mxu0 0.0
    %74 = vmatpush.msra.mxu0 0.0
    %75 = vmatpush.msra.mxu0 0.0
    %76 = vmatpush.msra.mxu0 0.0
    %77 = vmatpush.msra.mxu0 0.0
    %78 = vmatpush.msra.mxu0 0.0
    %79 = vmatpush.msra.mxu0 0.0
    %80 = vmatpush.msra.mxu0 0.0
    %81 = vmatpush.msra.mxu0 0.0
    %82 = vmatpush.msra.mxu0 0.0
    %83 = vmatpush.msra.mxu0 0.0
    %84 = vmatpush.msra.mxu0 0.0
    %85 = vmatpush.msra.mxu0 0.0
    %86 = vmatpush.msra.mxu0 %v44
    %87 = vmatmul.f32.gmra.mxu0 %v49
    %v88 = vpop.f32.mrf.mxu0
    %v89 = vadd.f32 0.0, %v88
    %90 = vdwg.mxu0
    %91 = vmatpush.msra.mxu0 0.0
    %92 = vmatpush.msra.mxu0 0.0
    %93 = vmatpush.msra.mxu0 0.0
    %94 = vmatpush.msra.mxu0 0.0
    %95 = vmatpush.msra.mxu0 0.0
    %96 = vmatpush.msra.mxu0 0.0
    %97 = vmatpush.msra.mxu0 0.0
    %98 = vmatpush.msra.mxu0 0.0
    %99 = vmatpush.msra.mxu0 0.0
    %100 = vmatpush.msra.mxu0 0.0
    %101 = vmatpush.msra.mxu0 0.0
    %102 = vmatpush.msra.mxu0 0.0
    %103 = vmatpush.msra.mxu0 0.0
    %104 = vmatpush.msra.mxu0 0.0
    %105 = vmatpush.msra.mxu0 0.0
    %106 = vmatpush.msra.mxu0 %v45
    %107 = vmatmul.f32.gmra.mxu0 %v49
    %v108 = vpop.f32.mrf.mxu0
    %v109 = vadd.f32 0.0, %v108
    %110 = vdwg.mxu0
    %111 = vmatpush.msra.mxu0 0.0
    %112 = vmatpush.msra.mxu0 0.0
    %113 = vmatpush.msra.mxu0 0.0
    %114 = vmatpush.msra.mxu0 0.0
    %115 = vmatpush.msra.mxu0 0.0
    %116 = vmatpush.msra.mxu0 0.0
    %117 = vmatpush.msra.mxu0 0.0
    %118 = vmatpush.msra.mxu0 0.0
    %119 = vmatpush.msra.mxu0 0.0
    %120 = vmatpush.msra.mxu0 0.0
    %121 = vmatpush.msra.mxu0 0.0
    %122 = vmatpush.msra.mxu0 0.0
    %123 = vmatpush.msra.mxu0 0.0
    %124 = vmatpush.msra.mxu0 0.0
    %125 = vmatpush.msra.mxu0 0.0
    %126 = vmatpush.msra.mxu0 %v46
    %127 = vmatmul.f32.gmra.mxu0 %v49
    %v128 = vpop.f32.mrf.mxu0
    %v129 = vadd.f32 0.0, %v128
    %130 = vdwg.mxu0
    %131 = vst [vmem:[#allocation7] sm:$0xff] %v69
    %132 = vst [vmem:[#allocation7 + $0x8] sm:$0xff] %v89
    %133 = vst [vmem:[#allocation7 + $0x10] sm:$0xff] %v109
    %134 = vst [vmem:[#allocation7 + $0x18] sm:$0xff] %v129
    %s135 = scalar_lea.vmem [#allocation5], 32
    %v136 = vld [vmem:[%s135] sm:$0xff]
    %v137 = vld [vmem:[%s135 + $0x8] sm:$0xff]
    %v138 = vld [vmem:[%s135 + $0x10] sm:$0xff]
    %v139 = vld [vmem:[%s135 + $0x18] sm:$0xff]
    %140 = vmatpush.msra.mxu0 0.0
    %141 = vmatpush.msra.mxu0 0.0
    %142 = vmatpush.msra.mxu0 0.0
    %143 = vmatpush.msra.mxu0 0.0
    %144 = vmatpush.msra.mxu0 0.0
    %145 = vmatpush.msra.mxu0 0.0
    %146 = vmatpush.msra.mxu0 0.0
    %147 = vmatpush.msra.mxu0 0.0
    %148 = vmatpush.msra.mxu0 0.0
    %149 = vmatpush.msra.mxu0 0.0
    %150 = vmatpush.msra.mxu0 0.0
    %151 = vmatpush.msra.mxu0 0.0
    %152 = vmatpush.msra.mxu0 0.0
    %153 = vmatpush.msra.mxu0 0.0
    %154 = vmatpush.msra.mxu0 0.0
    %155 = vmatpush.msra.mxu0 %v136
    %156 = vmatmul.f32.gmra.mxu0 %v49
    %v157 = vpop.f32.mrf.mxu0
    %v158 = vadd.f32 0.0, %v157
    %159 = vdwg.mxu0
    %160 = vmatpush.msra.mxu0 0.0
    %161 = vmatpush.msra.mxu0 0.0
    %162 = vmatpush.msra.mxu0 0.0
    %163 = vmatpush.msra.mxu0 0.0
    %164 = vmatpush.msra.mxu0 0.0
    %165 = vmatpush.msra.mxu0 0.0
    %166 = vmatpush.msra.mxu0 0.0
    %167 = vmatpush.msra.mxu0 0.0
    %168 = vmatpush.msra.mxu0 0.0
    %169 = vmatpush.msra.mxu0 0.0
    %170 = vmatpush.msra.mxu0 0.0
    %171 = vmatpush.msra.mxu0 0.0
    %172 = vmatpush.msra.mxu0 0.0
    %173 = vmatpush.msra.mxu0 0.0
    %174 = vmatpush.msra.mxu0 0.0
    %175 = vmatpush.msra.mxu0 %v137
    %176 = vmatmul.f32.gmra.mxu0 %v49
    %v177 = vpop.f32.mrf.mxu0
    %v178 = vadd.f32 0.0, %v177
    %179 = vdwg.mxu0
    %180 = vmatpush.msra.mxu0 0.0
    %181 = vmatpush.msra.mxu0 0.0
    %182 = vmatpush.msra.mxu0 0.0
    %183 = vmatpush.msra.mxu0 0.0
    %184 = vmatpush.msra.mxu0 0.0
    %185 = vmatpush.msra.mxu0 0.0
    %186 = vmatpush.msra.mxu0 0.0
    %187 = vmatpush.msra.mxu0 0.0
    %188 = vmatpush.msra.mxu0 0.0
    %189 = vmatpush.msra.mxu0 0.0
    %190 = vmatpush.msra.mxu0 0.0
    %191 = vmatpush.msra.mxu0 0.0
    %192 = vmatpush.msra.mxu0 0.0
    %193 = vmatpush.msra.mxu0 0.0
    %194 = vmatpush.msra.mxu0 0.0
    %195 = vmatpush.msra.mxu0 %v138
    %196 = vmatmul.f32.gmra.mxu0 %v49
    %v197 = vpop.f32.mrf.mxu0
    %v198 = vadd.f32 0.0, %v197
    %199 = vdwg.mxu0
    %200 = vmatpush.msra.mxu0 0.0
    %201 = vmatpush.msra.mxu0 0.0
    %202 = vmatpush.msra.mxu0 0.0
    %203 = vmatpush.msra.mxu0 0.0
    %204 = vmatpush.msra.mxu0 0.0
    %205 = vmatpush.msra.mxu0 0.0
    %206 = vmatpush.msra.mxu0 0.0
    %207 = vmatpush.msra.mxu0 0.0
    %208 = vmatpush.msra.mxu0 0.0
    %209 = vmatpush.msra.mxu0 0.0
    %210 = vmatpush.msra.mxu0 0.0
    %211 = vmatpush.msra.mxu0 0.0
    %212 = vmatpush.msra.mxu0 0.0
    %213 = vmatpush.msra.mxu0 0.0
    %214 = vmatpush.msra.mxu0 0.0
    %215 = vmatpush.msra.mxu0 %v139
    %216 = vmatmul.f32.gmra.mxu0 %v49
    %v217 = vpop.f32.mrf.mxu0
    %v218 = vadd.f32 0.0, %v217
    %219 = vdwg.mxu0
    %s220 = scalar_lea.vmem [#allocation7], 32
    %221 = vst [vmem:[%s220] sm:$0xff] %v158
    %222 = vst [vmem:[%s220 + $0x8] sm:$0xff] %v178
    %223 = vst [vmem:[%s220 + $0x10] sm:$0xff] %v198
    %224 = vst [vmem:[%s220 + $0x18] sm:$0xff] %v218
    %s225 = scalar_lea.vmem [#allocation5], 64
    %v226 = vld [vmem:[%s225] sm:$0xff]
    %v227 = vld [vmem:[%s225 + $0x8] sm:$0xff]
    %v228 = vld [vmem:[%s225 + $0x10] sm:$0xff]
    %v229 = vld [vmem:[%s225 + $0x18] sm:$0xff]
    %230 = vmatpush.msra.mxu0 0.0
    %231 = vmatpush.msra.mxu0 0.0
    %232 = vmatpush.msra.mxu0 0.0
    %233 = vmatpush.msra.mxu0 0.0
    %234 = vmatpush.msra.mxu0 0.0
    %235 = vmatpush.msra.mxu0 0.0
    %236 = vmatpush.msra.mxu0 0.0
    %237 = vmatpush.msra.mxu0 0.0
    %238 = vmatpush.msra.mxu0 0.0
    %239 = vmatpush.msra.mxu0 0.0
    %240 = vmatpush.msra.mxu0 0.0
    %241 = vmatpush.msra.mxu0 0.0
    %242 = vmatpush.msra.mxu0 0.0
    %243 = vmatpush.msra.mxu0 0.0
    %244 = vmatpush.msra.mxu0 0.0
    %245 = vmatpush.msra.mxu0 %v226
    %246 = vmatmul.f32.gmra.mxu0 %v49
    %v247 = vpop.f32.mrf.mxu0
    %v248 = vadd.f32 0.0, %v247
    %249 = vdwg.mxu0
    %250 = vmatpush.msra.mxu0 0.0
    %251 = vmatpush.msra.mxu0 0.0
    %252 = vmatpush.msra.mxu0 0.0
    %253 = vmatpush.msra.mxu0 0.0
    %254 = vmatpush.msra.mxu0 0.0
    %255 = vmatpush.msra.mxu0 0.0
    %256 = vmatpush.msra.mxu0 0.0
    %257 = vmatpush.msra.mxu0 0.0
    %258 = vmatpush.msra.mxu0 0.0
    %259 = vmatpush.msra.mxu0 0.0
    %260 = vmatpush.msra.mxu0 0.0
    %261 = vmatpush.msra.mxu0 0.0
    %262 = vmatpush.msra.mxu0 0.0
    %263 = vmatpush.msra.mxu0 0.0
    %264 = vmatpush.msra.mxu0 0.0
    %265 = vmatpush.msra.mxu0 %v227
    %266 = vmatmul.f32.gmra.mxu0 %v49
    %v267 = vpop.f32.mrf.mxu0
    %v268 = vadd.f32 0.0, %v267
    %269 = vdwg.mxu0
    %270 = vmatpush.msra.mxu0 0.0
    %271 = vmatpush.msra.mxu0 0.0
    %272 = vmatpush.msra.mxu0 0.0
    %273 = vmatpush.msra.mxu0 0.0
    %274 = vmatpush.msra.mxu0 0.0
    %275 = vmatpush.msra.mxu0 0.0
    %276 = vmatpush.msra.mxu0 0.0
    %277 = vmatpush.msra.mxu0 0.0
    %278 = vmatpush.msra.mxu0 0.0
    %279 = vmatpush.msra.mxu0 0.0
    %280 = vmatpush.msra.mxu0 0.0
    %281 = vmatpush.msra.mxu0 0.0
    %282 = vmatpush.msra.mxu0 0.0
    %283 = vmatpush.msra.mxu0 0.0
    %284 = vmatpush.msra.mxu0 0.0
    %285 = vmatpush.msra.mxu0 %v228
    %286 = vmatmul.f32.gmra.mxu0 %v49
    %v287 = vpop.f32.mrf.mxu0
    %v288 = vadd.f32 0.0, %v287
    %289 = vdwg.mxu0
    %290 = vmatpush.msra.mxu0 0.0
    %291 = vmatpush.msra.mxu0 0.0
    %292 = vmatpush.msra.mxu0 0.0
    %293 = vmatpush.msra.mxu0 0.0
    %294 = vmatpush.msra.mxu0 0.0
    %295 = vmatpush.msra.mxu0 0.0
    %296 = vmatpush.msra.mxu0 0.0
    %297 = vmatpush.msra.mxu0 0.0
    %298 = vmatpush.msra.mxu0 0.0
    %299 = vmatpush.msra.mxu0 0.0
    %300 = vmatpush.msra.mxu0 0.0
    %301 = vmatpush.msra.mxu0 0.0
    %302 = vmatpush.msra.mxu0 0.0
    %303 = vmatpush.msra.mxu0 0.0
    %304 = vmatpush.msra.mxu0 0.0
    %305 = vmatpush.msra.mxu0 %v229
    %306 = vmatmul.f32.gmra.mxu0 %v49
    %v307 = vpop.f32.mrf.mxu0
    %v308 = vadd.f32 0.0, %v307
    %309 = vdwg.mxu0
    %s310 = scalar_lea.vmem [#allocation7], 64
    %311 = vst [vmem:[%s310] sm:$0xff] %v248
    %312 = vst [vmem:[%s310 + $0x8] sm:$0xff] %v268
    %313 = vst [vmem:[%s310 + $0x10] sm:$0xff] %v288
    %314 = vst [vmem:[%s310 + $0x18] sm:$0xff] %v308
    %s315 = scalar_lea.vmem [#allocation5], 96
    %v316 = vld [vmem:[%s315] sm:$0xff]
    %v317 = vld [vmem:[%s315 + $0x8] sm:$0xff]
    %v318 = vld [vmem:[%s315 + $0x10] sm:$0xff]
    %v319 = vld [vmem:[%s315 + $0x18] sm:$0xff]
    %320 = vmatpush.msra.mxu0 0.0
    %321 = vmatpush.msra.mxu0 0.0
    %322 = vmatpush.msra.mxu0 0.0
    %323 = vmatpush.msra.mxu0 0.0
    %324 = vmatpush.msra.mxu0 0.0
    %325 = vmatpush.msra.mxu0 0.0
    %326 = vmatpush.msra.mxu0 0.0
    %327 = vmatpush.msra.mxu0 0.0
    %328 = vmatpush.msra.mxu0 0.0
    %329 = vmatpush.msra.mxu0 0.0
    %330 = vmatpush.msra.mxu0 0.0
    %331 = vmatpush.msra.mxu0 0.0
    %332 = vmatpush.msra.mxu0 0.0
    %333 = vmatpush.msra.mxu0 0.0
    %334 = vmatpush.msra.mxu0 0.0
    %335 = vmatpush.msra.mxu0 %v316
    %336 = vmatmul.f32.gmra.mxu0 %v49
    %v337 = vpop.f32.mrf.mxu0
    %v338 = vadd.f32 0.0, %v337
    %339 = vdwg.mxu0
    %340 = vmatpush.msra.mxu0 0.0
    %341 = vmatpush.msra.mxu0 0.0
    %342 = vmatpush.msra.mxu0 0.0
    %343 = vmatpush.msra.mxu0 0.0
    %344 = vmatpush.msra.mxu0 0.0
    %345 = vmatpush.msra.mxu0 0.0
    %346 = vmatpush.msra.mxu0 0.0
    %347 = vmatpush.msra.mxu0 0.0
    %348 = vmatpush.msra.mxu0 0.0
    %349 = vmatpush.msra.mxu0 0.0
    %350 = vmatpush.msra.mxu0 0.0
    %351 = vmatpush.msra.mxu0 0.0
    %352 = vmatpush.msra.mxu0 0.0
    %353 = vmatpush.msra.mxu0 0.0
    %354 = vmatpush.msra.mxu0 0.0
    %355 = vmatpush.msra.mxu0 %v317
    %356 = vmatmul.f32.gmra.mxu0 %v49
    %v357 = vpop.f32.mrf.mxu0
    %v358 = vadd.f32 0.0, %v357
    %359 = vdwg.mxu0
    %360 = vmatpush.msra.mxu0 0.0
    %361 = vmatpush.msra.mxu0 0.0
    %362 = vmatpush.msra.mxu0 0.0
    %363 = vmatpush.msra.mxu0 0.0
    %364 = vmatpush.msra.mxu0 0.0
    %365 = vmatpush.msra.mxu0 0.0
    %366 = vmatpush.msra.mxu0 0.0
    %367 = vmatpush.msra.mxu0 0.0
    %368 = vmatpush.msra.mxu0 0.0
    %369 = vmatpush.msra.mxu0 0.0
    %370 = vmatpush.msra.mxu0 0.0
    %371 = vmatpush.msra.mxu0 0.0
    %372 = vmatpush.msra.mxu0 0.0
    %373 = vmatpush.msra.mxu0 0.0
    %374 = vmatpush.msra.mxu0 0.0
    %375 = vmatpush.msra.mxu0 %v318
    %376 = vmatmul.f32.gmra.mxu0 %v49
    %v377 = vpop.f32.mrf.mxu0
    %v378 = vadd.f32 0.0, %v377
    %379 = vdwg.mxu0
    %380 = vmatpush.msra.mxu0 0.0
    %381 = vmatpush.msra.mxu0 0.0
    %382 = vmatpush.msra.mxu0 0.0
    %383 = vmatpush.msra.mxu0 0.0
    %384 = vmatpush.msra.mxu0 0.0
    %385 = vmatpush.msra.mxu0 0.0
    %386 = vmatpush.msra.mxu0 0.0
    %387 = vmatpush.msra.mxu0 0.0
    %388 = vmatpush.msra.mxu0 0.0
    %389 = vmatpush.msra.mxu0 0.0
    %390 = vmatpush.msra.mxu0 0.0
    %391 = vmatpush.msra.mxu0 0.0
    %392 = vmatpush.msra.mxu0 0.0
    %393 = vmatpush.msra.mxu0 0.0
    %394 = vmatpush.msra.mxu0 0.0
    %395 = vmatpush.msra.mxu0 %v319
    %396 = vmatmul.f32.gmra.mxu0 %v49
    %v397 = vpop.f32.mrf.mxu0
    %v398 = vadd.f32 0.0, %v397
    %399 = vdwg.mxu0
    %s400 = scalar_lea.vmem [#allocation7], 96
    %401 = vst [vmem:[%s400] sm:$0xff] %v338
    %402 = vst [vmem:[%s400 + $0x8] sm:$0xff] %v358
    %403 = vst [vmem:[%s400 + $0x10] sm:$0xff] %v378
    %404 = vst [vmem:[%s400 + $0x18] sm:$0xff] %v398
    // Predicated region
    $region18: #{tpu_custom_call.1} parent=1 // pred_check
      _
    $region19: #{tpu_custom_call.1} parent=1 // pred_check_branch
      %406 = sbr.rel (0) target = $region21
    $region20: #{tpu_custom_call.1} parent=1 // pred_region
      %408 = vsyncadd [#allocation4], 0
      %s409 = sshll.u32 [#allocation7], 4
      %s410 = int_to_ptr.vmem [resolvable:$true] %s409
      %s411 = sshll.u32 %s2, 4
      %s412 = int_to_ptr.hbm [resolvable:$true] %s411
      %417 = dma.vmem_to_hbm [thread:$0]  %s410, 2048, %s412, [#allocation4], 512, 512, 32
    $region21: #{tpu_custom_call.1} parent=1 // pred_fallthru
      _
    // Predicated region
    $region22: #{tpu_custom_call.1} parent=1 // pred_check
      _
    $region23: #{tpu_custom_call.1} parent=1 // pred_check_branch
      %419 = sbr.rel (0) target = $region25
    $region24: #{tpu_custom_call.1} parent=1 // pred_region
      %421 = dma.done [#allocation4], 2048
    $region25: #{tpu_custom_call.1} parent=1 // pred_fallthru
      _
    %422 = vsyncpa [#allocation3], 1
    %423 = vsyncpa [#allocation6], 1
    %424 = vsyncpa [#allocation4], 1

</llo_original>
